<compile_context>
chip_gen: v5e
topology: v5e:2x2
jax: 0.10.0
libtpu: 0.0.40
codegen_flags: <defaults>
</compile_context>

<pallas_src>
import functools

import jax
import jax.numpy as jnp
from jax.experimental import pallas as pl
from jax.experimental.pallas import tpu as pltpu

J_SCALES = 3                      # wavelet scales
N_FEAT_GROUPS = J_SCALES + 1      # [low-pass P^8 X, |psi1 X|, |psi2 X|, |psi3 X|]


# --------------------------- VMEM budget helper ------------------------------

def _vmem_cap_bytes():
    """Generation-aware cap: ~85% of physical VMEM (leave Mosaic headroom)."""
    try:
        return int(pltpu.get_tpu_info().vmem_capacity_bytes * 0.85)
    except Exception:
        return 56 * 1024 * 1024    # safe on every listed generation (v7x = 64 MiB)


def _vmem_limit_bytes(n, d):
    npad = ((n + 127) // 128) * 128
    dpad = max(8, d)
    # live f32 (n, n) panels (Dmat/W reused, WnT) + bf16 P^T + feature tiles
    # + double-buffered input blocks + slack.
    need = (3 * npad * npad * 4 + npad * npad * 2
            + 16 * dpad * npad * 4 + (2 << 20))
    return int(max(8 << 20, min(_vmem_cap_bytes(), need)))


# ----------------------------- shared compute --------------------------------

def _half_identity(n):
    """0.5 * I as an (n, n) f32 panel (built once, amortized over 8 P-applies)."""
    r = jax.lax.broadcasted_iota(jnp.int32, (n, n), 0)
    c = jax.lax.broadcasted_iota(jnp.int32, (n, n), 1)
    return jnp.where(r == c, jnp.float32(0.5), jnp.float32(0.0))


def _wavelet_groups_t(X, Xt, alphas_smem, w_idx, eye_half, *, eps, threshold):
    """Affinity graph + lazy-random-walk diffusion wavelets, transposed layout.

    X:  (n, d) f32 point cloud (only used for the per-coordinate columns so the
        kernel never needs an in-kernel lane->sublane transpose).
    Xt: (d, n) f32 transposed cloud — the primary feature operand.
    alphas_smem: (n_weights, d) SMEM ref; w_idx: which alpha row.
    eye_half: (n, n) 0.5*I panel (hoisted by the caller).
    Returns the 4 feature groups, each (d, n) f32.
    """
    n, d = X.shape
    eps_f = jnp.float32(eps)
    thr_f = jnp.float32(threshold)

    # ---- pairwise squared distances of the alpha-scaled cloud (VPU) ---------
    # alpha pre-scales the length-n vectors; the diagonal is exactly 0 because
    # both operands of the broadcast-subtract are the same IEEE products.
    Dmat = None
    for k in range(d):                                 # d is tiny & static
        a_k = alphas_smem[w_idx, k]                    # scalar SMEM read
        col = X[:, k:k + 1] * a_k                      # (n, 1)
        row = Xt[k:k + 1, :] * a_k                     # (1, n)
        diff = col - row                               # (n, n)
        Dmat = diff * diff if Dmat is None else Dmat + diff * diff

    # ---- affinity W = 1/(D+eps); zero self & sub-threshold entries ----------
    # Exact divide (not approx reciprocal) so the `< threshold` mask matches the
    # PyTorch reference.  `Dmat <= 0` is the robust form of `W == 1/eps`.
    W = 1.0 / (Dmat + eps_f)
    W = jnp.where((Dmat <= 0.0) | (W < thr_f), 0.0, W)

    # ---- P^T = 0.5*I + W * diag(1/(2*deg)); W symmetric -> col-sum == row-sum
    deg = jnp.sum(W, axis=0, keepdims=True)                         # (1, n)
    inv2deg = jnp.where(deg > 0.0, pl.reciprocal(2.0 * deg, approx=True), 0.0)
    Pt = (W * inv2deg + eye_half).astype(jnp.bfloat16)              # (n, n)

    def p_apply(Ft):                                   # (d, n) @ (n, n) on MXU
        return jnp.dot(Ft.astype(jnp.bfloat16), Pt,
                       preferred_element_type=jnp.float32)

    F1 = p_apply(Xt)                                   # (P    X)^T
    F2 = p_apply(F1)                                   # (P^2  X)^T
    F4 = p_apply(p_apply(F2))                          # (P^4  X)^T
    F8 = p_apply(p_apply(p_apply(p_apply(F4))))        # (P^8  X)^T

    return (F8, jnp.abs(F1 - F2), jnp.abs(F2 - F4), jnp.abs(F4 - F8))


# ------------------------- per-node feature kernel ---------------------------

def _feat_full_kernel(alphas_ref, x_ref, xt_ref, out_ref, *, eps, threshold):
    w = pl.program_id(0)
    n, d = x_ref.shape
    eye_half = _half_identity(n)
    groups = _wavelet_groups_t(x_ref[...], xt_ref[...], alphas_ref, w, eye_half,
                               eps=eps, threshold=threshold)
    for g, feat in enumerate(groups):                  # lane-dense (d, n) stores
        out_ref[0, g * d:(g + 1) * d, :] = feat


def graph_feat_learning_layer(point_cloud, alphas, eps, threshold):
    """JAX/Pallas equivalent of GraphFeatLearningLayer.forward -> (N, n_weights*4*d)."""
    pc = point_cloud.astype(jnp.float32)
    n, d = pc.shape
    n_weights = alphas.shape[0]
    kernel = functools.partial(_feat_full_kernel, eps=float(eps),
                               threshold=float(threshold))
    out = pl.pallas_call(
        kernel,
        out_shape=jax.ShapeDtypeStruct((n_weights, N_FEAT_GROUPS * d, n),
                                       jnp.float32),
        grid_spec=pltpu.PrefetchScalarGridSpec(
            num_scalar_prefetch=0,
            grid=(n_weights,),
            in_specs=[
                # whole alpha table resident in SMEM, indexed by program_id
                pl.BlockSpec(memory_space=pltpu.MemorySpace.SMEM),
                # point cloud + its transpose resident in VMEM every step
                pl.BlockSpec((n, d), lambda i: (0, 0)),
                pl.BlockSpec((d, n), lambda i: (0, 0)),
            ],
            out_specs=pl.BlockSpec((1, N_FEAT_GROUPS * d, n),
                                   lambda i: (i, 0, 0)),
        ),
        compiler_params=pltpu.CompilerParams(
            dimension_semantics=("parallel",),
            vmem_limit_bytes=_vmem_limit_bytes(n, d)),
    )(alphas.astype(jnp.float32), pc, pc.T)
    # (n_weights, 4*d, n) -> (n, n_weights*4*d): exactly torch.cat(PSI, dim=1).
    return jnp.transpose(out, (2, 0, 1)).reshape(n, n_weights * N_FEAT_GROUPS * d)


# ---------------------- fused node-mean feature kernel -----------------------

def _feat_mean_kernel(alphas_ref, x_ref, xt_ref, out_ref, *, eps, threshold,
                      n_weights, inv_n):
    X = x_ref[0]                                        # (n, d)
    Xt = xt_ref[0]                                      # (d, n)
    n, d = X.shape
    eye_half = _half_identity(n)                        # hoisted over weights
    ones_row = jnp.ones((1, n), jnp.float32)            # hoisted over weights
    for w in range(n_weights):                          # unrolled; alphas in SMEM
        groups = _wavelet_groups_t(X, Xt, alphas_ref, w, eye_half,
                                   eps=eps, threshold=threshold)
        for g, feat in enumerate(groups):
            # node-mean of a (d, n) group as a (1, d) slab: contract n on both.
            m = jnp.einsum('on,dn->od', ones_row, feat,
                           preferred_element_type=jnp.float32) * inv_n
            o = (w * N_FEAT_GROUPS + g) * d
            out_ref[0, 0:1, o:o + d] = m                # one wide output row total


def graph_feat_mean_batched(point_clouds, alphas, eps, threshold):
    """Fused `graph_feat(pc, eps).mean(0)` for a stacked batch of same-size
    point clouds: (B, N, d) -> (B, n_weights * 4 * d).  One pallas_call over the
    batch; all weights are handled inside each grid step and only one
    (n_weights*4*d)-wide row per cloud ever hits HBM."""
    pcs = point_clouds.astype(jnp.float32)
    b, n, d = pcs.shape
    n_weights = alphas.shape[0]
    k_feat = n_weights * N_FEAT_GROUPS * d
    kernel = functools.partial(_feat_mean_kernel, eps=float(eps),
                               threshold=float(threshold),
                               n_weights=int(n_weights), inv_n=1.0 / n)
    out = pl.pallas_call(
        kernel,
        out_shape=jax.ShapeDtypeStruct((b, 1, k_feat), jnp.float32),
        grid_spec=pltpu.PrefetchScalarGridSpec(
            num_scalar_prefetch=0,
            grid=(b,),
            in_specs=[
                pl.BlockSpec(memory_space=pltpu.MemorySpace.SMEM),    # alphas
                pl.BlockSpec((1, n, d), lambda bi: (bi, 0, 0)),       # X_b
                pl.BlockSpec((1, d, n), lambda bi: (bi, 0, 0)),       # X_b^T
            ],
            out_specs=pl.BlockSpec((1, 1, k_feat), lambda bi: (bi, 0, 0)),
        ),
        compiler_params=pltpu.CompilerParams(
            dimension_semantics=("parallel",),        # batch axis shards 2 TCs on v7x
            vmem_limit_bytes=_vmem_limit_bytes(n, d)),
    )(alphas.astype(jnp.float32), pcs, jnp.transpose(pcs, (0, 2, 1)))
    # per-row layout is [weight, group, coord] == torch.cat(PSI, dim=1).mean(0)
    return out.reshape(b, k_feat)


# --------------------------------- module -----------------------------------

def _standard_scale(x):
    """sklearn StandardScaler.fit_transform (per-column, population std)."""
    mean = jnp.mean(x, axis=0, keepdims=True)
    std = jnp.std(x, axis=0, keepdims=True)
    std = jnp.where(std == 0.0, 1.0, std)
    return (x - mean) / std


class PointCloudFeatLearning:
    """JAX equivalent of the PyTorch module (in-memory synthetic point clouds)."""

    def __init__(self, point_clouds, n_weights, threshold, key):
        # replaces pickle loading of pc.pkl + StandardScaler
        self.subsampled_pcs = [_standard_scale(jnp.asarray(pc, jnp.float32))
                               for pc in point_clouds]
        self.dimension = int(self.subsampled_pcs[0].shape[1])
        # nn.Parameter(torch.rand(n_weights, dimension)) -> deterministic uniform [0,1)
        self.alphas = jax.random.uniform(
            key, (n_weights, self.dimension), dtype=jnp.float32)
        self.n_weights = n_weights
        self.threshold = threshold
        self.input_dim = graph_feat_learning_layer(
            self.subsampled_pcs[0], self.alphas, 0.01, self.threshold).shape[1]

    def forward(self, batch, eps):
        pcs = [self.subsampled_pcs[i] for i in batch]
        shapes = {tuple(p.shape) for p in pcs}
        if len(shapes) == 1:
            # one pallas_call for the whole batch (weights fused inside the body)
            stacked = jnp.stack(pcs, axis=0)                  # (B, N, d)
            return graph_feat_mean_batched(stacked, self.alphas, eps, self.threshold)
        # fallback for clouds of different sizes: per-cloud fused-mean call
        rows = [graph_feat_mean_batched(p[None], self.alphas, eps, self.threshold)[0]
                for p in pcs]
        return jnp.stack(rows, axis=0)


if __name__ == "__main__":
    key = jax.random.PRNGKey(0)
    k_pc, k_alpha = jax.random.split(key)

    # small synthetic dataset: 3 point clouds, N=64 points each, d=3 coordinates
    n_points, dim, n_clouds = 64, 3, 3
    pc_keys = jax.random.split(k_pc, n_clouds)
    point_clouds = [jax.random.normal(pc_keys[i], (n_points, dim), dtype=jnp.float32)
                    for i in range(n_clouds)]

    n_weights = 2
    threshold = 0.1
    eps = 0.01

    model = PointCloudFeatLearning(point_clouds, n_weights, threshold, k_alpha)

    batch = [0, 2]
    out = model.forward(batch, eps)
    out = jax.block_until_ready(out)

    expected_feat = n_weights * N_FEAT_GROUPS * dim
    assert out.shape == (len(batch), expected_feat), out.shape
    assert out.dtype == jnp.float32
    assert bool(jnp.all(jnp.isfinite(out)))
    assert model.input_dim == expected_feat
    print("KERNEL_OK")
</pallas_src>

<mosaic_0001>
module attributes {stable_mosaic.version = 11 : i64} {
  func.func @_feat_full_kernel(%arg0: i32, %arg1: memref<2x3xf32, #tpu.memory_space<smem>>, %arg2: memref<64x3xf32, #tpu.memory_space<vmem>>, %arg3: memref<3x64xf32, #tpu.memory_space<vmem>>, %arg4: memref<1x12x64xf32, #tpu.memory_space<vmem>>) attributes {dimension_semantics = [#tpu.dimension_semantics<parallel>], iteration_bounds = array<i64: 2>, scalar_prefetch = 0 : i64, scratch_operands = 0 : i64, tpu.core_type = #tpu.core_type<tc>, window_params = [{transform_indices = @transform_0, window_bounds = array<i64: 2, 3>}, {pipeline_mode = #tpu.pipeline_mode<synchronous>, transform_indices = @transform_1, window_bounds = array<i64: 64, 3>}, {pipeline_mode = #tpu.pipeline_mode<synchronous>, transform_indices = @transform_2, window_bounds = array<i64: 3, 64>}, {transform_indices = @transform_3, window_bounds = array<i64: 1, 12, 64>}]} {
    %0 = tpu.iota {dimensions = array<i32: 0>} : vector<64x64xi32>
    %1 = tpu.iota {dimensions = array<i32: 1>} : vector<64x64xi32>
    %2 = arith.cmpi eq, %0, %1 : vector<64x64xi32>
    %cst = arith.constant 5.000000e-01 : f32
    %cst_0 = arith.constant 0.000000e+00 : f32
    %3 = vector.broadcast %cst : f32 to vector<64x64xf32>
    %4 = vector.broadcast %cst_0 : f32 to vector<64x64xf32>
    %5 = arith.select %2, %3, %4 : vector<64x64xi1>, vector<64x64xf32>
    %c0 = arith.constant 0 : index
    %c0_1 = arith.constant 0 : index
    %6 = vector.load %arg2[%c0, %c0_1] : memref<64x3xf32, #tpu.memory_space<vmem>>, vector<64x3xf32>
    %c0_2 = arith.constant 0 : index
    %c0_3 = arith.constant 0 : index
    %7 = vector.load %arg3[%c0_2, %c0_3] : memref<3x64xf32, #tpu.memory_space<vmem>>, vector<3x64xf32>
    %8 = arith.index_cast %arg0 : i32 to index
    %c0_4 = arith.constant 0 : index
    %9 = memref.load %arg1[%8, %c0_4] : memref<2x3xf32, #tpu.memory_space<smem>>
    %10 = vector.extract_strided_slice %6 {offsets = [0, 0], sizes = [64, 1], strides = [1, 1]} : vector<64x3xf32> to vector<64x1xf32>
    %11 = vector.broadcast %9 : f32 to vector<64x1xf32>
    %12 = arith.mulf %10, %11 : vector<64x1xf32>
    %13 = vector.extract_strided_slice %7 {offsets = [0, 0], sizes = [1, 64], strides = [1, 1]} : vector<3x64xf32> to vector<1x64xf32>
    %14 = vector.broadcast %9 : f32 to vector<1x64xf32>
    %15 = arith.mulf %13, %14 : vector<1x64xf32>
    %16 = vector.broadcast %12 : vector<64x1xf32> to vector<64x64xf32>
    %17 = vector.broadcast %15 : vector<1x64xf32> to vector<64x64xf32>
    %18 = arith.subf %16, %17 : vector<64x64xf32>
    %19 = arith.mulf %18, %18 : vector<64x64xf32>
    %20 = arith.index_cast %arg0 : i32 to index
    %c1 = arith.constant 1 : index
    %21 = memref.load %arg1[%20, %c1] : memref<2x3xf32, #tpu.memory_space<smem>>
    %22 = vector.extract_strided_slice %6 {offsets = [0, 1], sizes = [64, 1], strides = [1, 1]} : vector<64x3xf32> to vector<64x1xf32>
    %23 = vector.broadcast %21 : f32 to vector<64x1xf32>
    %24 = arith.mulf %22, %23 : vector<64x1xf32>
    %25 = vector.extract_strided_slice %7 {offsets = [1, 0], sizes = [1, 64], strides = [1, 1]} : vector<3x64xf32> to vector<1x64xf32>
    %26 = vector.broadcast %21 : f32 to vector<1x64xf32>
    %27 = arith.mulf %25, %26 : vector<1x64xf32>
    %28 = vector.broadcast %24 : vector<64x1xf32> to vector<64x64xf32>
    %29 = vector.broadcast %27 : vector<1x64xf32> to vector<64x64xf32>
    %30 = arith.subf %28, %29 : vector<64x64xf32>
    %31 = arith.mulf %30, %30 : vector<64x64xf32>
    %32 = arith.addf %19, %31 : vector<64x64xf32>
    %33 = arith.index_cast %arg0 : i32 to index
    %c2 = arith.constant 2 : index
    %34 = memref.load %arg1[%33, %c2] : memref<2x3xf32, #tpu.memory_space<smem>>
    %35 = vector.extract_strided_slice %6 {offsets = [0, 2], sizes = [64, 1], strides = [1, 1]} : vector<64x3xf32> to vector<64x1xf32>
    %36 = vector.broadcast %34 : f32 to vector<64x1xf32>
    %37 = arith.mulf %35, %36 : vector<64x1xf32>
    %38 = vector.extract_strided_slice %7 {offsets = [2, 0], sizes = [1, 64], strides = [1, 1]} : vector<3x64xf32> to vector<1x64xf32>
    %39 = vector.broadcast %34 : f32 to vector<1x64xf32>
    %40 = arith.mulf %38, %39 : vector<1x64xf32>
    %41 = vector.broadcast %37 : vector<64x1xf32> to vector<64x64xf32>
    %42 = vector.broadcast %40 : vector<1x64xf32> to vector<64x64xf32>
    %43 = arith.subf %41, %42 : vector<64x64xf32>
    %44 = arith.mulf %43, %43 : vector<64x64xf32>
    %45 = arith.addf %32, %44 : vector<64x64xf32>
    %cst_5 = arith.constant 0.00999999977 : f32
    %46 = vector.broadcast %cst_5 : f32 to vector<64x64xf32>
    %47 = arith.addf %45, %46 : vector<64x64xf32>
    %cst_6 = arith.constant 1.000000e+00 : f32
    %48 = vector.broadcast %cst_6 : f32 to vector<64x64xf32>
    %49 = arith.divf %48, %47 : vector<64x64xf32>
    %cst_7 = arith.constant 0.000000e+00 : f32
    %50 = vector.broadcast %cst_7 : f32 to vector<64x64xf32>
    %51 = arith.cmpf ole, %45, %50 : vector<64x64xf32>
    %cst_8 = arith.constant 1.000000e-01 : f32
    %52 = vector.broadcast %cst_8 : f32 to vector<64x64xf32>
    %53 = arith.cmpf olt, %49, %52 : vector<64x64xf32>
    %54 = arith.ori %51, %53 : vector<64x64xi1>
    %cst_9 = arith.constant 0.000000e+00 : f32
    %55 = vector.broadcast %cst_9 : f32 to vector<64x64xf32>
    %56 = arith.select %54, %55, %49 : vector<64x64xi1>, vector<64x64xf32>
    %cst_10 = arith.constant dense<0.000000e+00> : vector<64xf32>
    %57 = vector.multi_reduction <add>, %56, %cst_10 [0] : vector<64x64xf32> to vector<64xf32>
    %58 = vector.shape_cast %57 : vector<64xf32> to vector<1x64xf32>
    %cst_11 = arith.constant 0.000000e+00 : f32
    %59 = vector.broadcast %cst_11 : f32 to vector<1x64xf32>
    %60 = arith.cmpf ogt, %58, %59 : vector<1x64xf32>
    %cst_12 = arith.constant 2.000000e+00 : f32
    %61 = vector.broadcast %cst_12 : f32 to vector<1x64xf32>
    %62 = arith.mulf %61, %58 : vector<1x64xf32>
    %63 = tpu.reciprocal %62 {approx = true} : vector<1x64xf32> -> vector<1x64xf32>
    %cst_13 = arith.constant 0.000000e+00 : f32
    %64 = vector.broadcast %cst_13 : f32 to vector<1x64xf32>
    %65 = arith.select %60, %63, %64 : vector<1x64xi1>, vector<1x64xf32>
    %66 = vector.broadcast %65 : vector<1x64xf32> to vector<64x64xf32>
    %67 = arith.mulf %56, %66 : vector<64x64xf32>
    %68 = arith.addf %67, %5 : vector<64x64xf32>
    %69 = arith.truncf %68 : vector<64x64xf32> to vector<64x64xbf16>
    %70 = arith.truncf %7 : vector<3x64xf32> to vector<3x64xbf16>
    %cst_14 = arith.constant dense<0.000000e+00> : vector<3x64xf32>
    %71 = tpu.matmul %70, %69, %cst_14 {dimension_numbers = #tpu.dot_dimension_numbers<[1], [0], [0], [1], [0, 0, 1, 1], [], []>} : vector<3x64xbf16>, vector<64x64xbf16>, vector<3x64xf32> -> vector<3x64xf32>
    %72 = arith.truncf %71 : vector<3x64xf32> to vector<3x64xbf16>
    %cst_15 = arith.constant dense<0.000000e+00> : vector<3x64xf32>
    %73 = tpu.matmul %72, %69, %cst_15 {dimension_numbers = #tpu.dot_dimension_numbers<[1], [0], [0], [1], [0, 0, 1, 1], [], []>} : vector<3x64xbf16>, vector<64x64xbf16>, vector<3x64xf32> -> vector<3x64xf32>
    %74 = arith.truncf %73 : vector<3x64xf32> to vector<3x64xbf16>
    %cst_16 = arith.constant dense<0.000000e+00> : vector<3x64xf32>
    %75 = tpu.matmul %74, %69, %cst_16 {dimension_numbers = #tpu.dot_dimension_numbers<[1], [0], [0], [1], [0, 0, 1, 1], [], []>} : vector<3x64xbf16>, vector<64x64xbf16>, vector<3x64xf32> -> vector<3x64xf32>
    %76 = arith.truncf %75 : vector<3x64xf32> to vector<3x64xbf16>
    %cst_17 = arith.constant dense<0.000000e+00> : vector<3x64xf32>
    %77 = tpu.matmul %76, %69, %cst_17 {dimension_numbers = #tpu.dot_dimension_numbers<[1], [0], [0], [1], [0, 0, 1, 1], [], []>} : vector<3x64xbf16>, vector<64x64xbf16>, vector<3x64xf32> -> vector<3x64xf32>
    %78 = arith.truncf %77 : vector<3x64xf32> to vector<3x64xbf16>
    %cst_18 = arith.constant dense<0.000000e+00> : vector<3x64xf32>
    %79 = tpu.matmul %78, %69, %cst_18 {dimension_numbers = #tpu.dot_dimension_numbers<[1], [0], [0], [1], [0, 0, 1, 1], [], []>} : vector<3x64xbf16>, vector<64x64xbf16>, vector<3x64xf32> -> vector<3x64xf32>
    %80 = arith.truncf %79 : vector<3x64xf32> to vector<3x64xbf16>
    %cst_19 = arith.constant dense<0.000000e+00> : vector<3x64xf32>
    %81 = tpu.matmul %80, %69, %cst_19 {dimension_numbers = #tpu.dot_dimension_numbers<[1], [0], [0], [1], [0, 0, 1, 1], [], []>} : vector<3x64xbf16>, vector<64x64xbf16>, vector<3x64xf32> -> vector<3x64xf32>
    %82 = arith.truncf %81 : vector<3x64xf32> to vector<3x64xbf16>
    %cst_20 = arith.constant dense<0.000000e+00> : vector<3x64xf32>
    %83 = tpu.matmul %82, %69, %cst_20 {dimension_numbers = #tpu.dot_dimension_numbers<[1], [0], [0], [1], [0, 0, 1, 1], [], []>} : vector<3x64xbf16>, vector<64x64xbf16>, vector<3x64xf32> -> vector<3x64xf32>
    %84 = arith.truncf %83 : vector<3x64xf32> to vector<3x64xbf16>
    %cst_21 = arith.constant dense<0.000000e+00> : vector<3x64xf32>
    %85 = tpu.matmul %84, %69, %cst_21 {dimension_numbers = #tpu.dot_dimension_numbers<[1], [0], [0], [1], [0, 0, 1, 1], [], []>} : vector<3x64xbf16>, vector<64x64xbf16>, vector<3x64xf32> -> vector<3x64xf32>
    %86 = arith.subf %71, %73 : vector<3x64xf32>
    %87 = math.absf %86 : vector<3x64xf32>
    %88 = arith.subf %73, %77 : vector<3x64xf32>
    %89 = math.absf %88 : vector<3x64xf32>
    %90 = arith.subf %77, %85 : vector<3x64xf32>
    %91 = math.absf %90 : vector<3x64xf32>
    %c0_22 = arith.constant 0 : index
    %c0_23 = arith.constant 0 : index
    %c0_24 = arith.constant 0 : index
    %92 = vector.load %arg4[%c0_22, %c0_23, %c0_24] : memref<1x12x64xf32, #tpu.memory_space<vmem>>, vector<1x3x64xf32>
    %93 = vector.shape_cast %92 : vector<1x3x64xf32> to vector<3x64xf32>
    %94 = vector.shape_cast %85 : vector<3x64xf32> to vector<1x3x64xf32>
    tpu.vector_store %arg4[%c0_22, %c0_23, %c0_24], %94 {strides = array<i32>} : memref<1x12x64xf32, #tpu.memory_space<vmem>>, vector<1x3x64xf32>,
    %c0_25 = arith.constant 0 : index
    %c3 = arith.constant 3 : index
    %c0_26 = arith.constant 0 : index
    %95 = vector.load %arg4[%c0_25, %c3, %c0_26] : memref<1x12x64xf32, #tpu.memory_space<vmem>>, vector<1x3x64xf32>
    %96 = vector.shape_cast %95 : vector<1x3x64xf32> to vector<3x64xf32>
    %97 = vector.shape_cast %87 : vector<3x64xf32> to vector<1x3x64xf32>
    tpu.vector_store %arg4[%c0_25, %c3, %c0_26], %97 {strides = array<i32>} : memref<1x12x64xf32, #tpu.memory_space<vmem>>, vector<1x3x64xf32>,
    %c0_27 = arith.constant 0 : index
    %c6 = arith.constant 6 : index
    %c0_28 = arith.constant 0 : index
    %98 = vector.load %arg4[%c0_27, %c6, %c0_28] : memref<1x12x64xf32, #tpu.memory_space<vmem>>, vector<1x3x64xf32>
    %99 = vector.shape_cast %98 : vector<1x3x64xf32> to vector<3x64xf32>
    %100 = vector.shape_cast %89 : vector<3x64xf32> to vector<1x3x64xf32>
    tpu.vector_store %arg4[%c0_27, %c6, %c0_28], %100 {strides = array<i32>} : memref<1x12x64xf32, #tpu.memory_space<vmem>>, vector<1x3x64xf32>,
    %c0_29 = arith.constant 0 : index
    %c9 = arith.constant 9 : index
    %c0_30 = arith.constant 0 : index
    %101 = vector.load %arg4[%c0_29, %c9, %c0_30] : memref<1x12x64xf32, #tpu.memory_space<vmem>>, vector<1x3x64xf32>
    %102 = vector.shape_cast %101 : vector<1x3x64xf32> to vector<3x64xf32>
    %103 = vector.shape_cast %91 : vector<3x64xf32> to vector<1x3x64xf32>
    tpu.vector_store %arg4[%c0_29, %c9, %c0_30], %103 {strides = array<i32>} : memref<1x12x64xf32, #tpu.memory_space<vmem>>, vector<1x3x64xf32>,
    return
  }
  func.func @transform_0(%arg0: i32) -> (i32, i32) {
    %c0_i32 = arith.constant 0 : i32
    %c0_i32_0 = arith.constant 0 : i32
    %c0_i32_1 = arith.constant 0 : i32
    return %c0_i32, %c0_i32_0 : i32, i32
  }
  func.func @transform_1(%arg0: i32) -> (i32, i32) {
    %c0_i32 = arith.constant 0 : i32
    %c0_i32_0 = arith.constant 0 : i32
    %c0_i32_1 = arith.constant 0 : i32
    return %c0_i32, %c0_i32_0 : i32, i32
  }
  func.func @transform_2(%arg0: i32) -> (i32, i32) {
    %c0_i32 = arith.constant 0 : i32
    %c0_i32_0 = arith.constant 0 : i32
    %c0_i32_1 = arith.constant 0 : i32
    return %c0_i32, %c0_i32_0 : i32, i32
  }
  func.func @transform_3(%arg0: i32) -> (i32, i32, i32) {
    %c0_i32 = arith.constant 0 : i32
    %c0_i32_0 = arith.constant 0 : i32
    %c0_i32_1 = arith.constant 0 : i32
    return %arg0, %c0_i32, %c0_i32_0 : i32, i32, i32
  }
}

</mosaic_0001>

<llo_original>
// kernel: tpu_custom_call.1
$region0: #{tpu_custom_call.1}
  #allocation0 [shape = 'u32[]', space=smem, size = 0x4, offset = 0x4, fixed_abs, tag = 'smem constant byte address 0x4 - core index']
  #allocation1 [shape = 'u32[72,128]{1,0:T(1,128)}', space=vmem, size = 0x9000, scoped, tag = 'internal scratch']
  %s0 = inlined_call_operand.vmem [shape: f32[2,3], index: 0, kind: input, shape index: {}]
  %s1 = inlined_call_operand.vmem [shape: f32[64,3], index: 1, kind: input, shape index: {}]
  %s2 = inlined_call_operand.vmem [shape: f32[3,64], index: 2, kind: input, shape index: {}]
  %s3 = inlined_call_operand.vmem [shape: f32[2,12,64], index: 3, kind: output, shape index: {}]
  %s4 = sld [smem:[#allocation0]]
  $region49: #{tpu_custom_call.1} parent=0
    _
  %s6 = ssub.s32 1, %s4
  %s7 = scalar_select 0, %s6, %s4
  $region1: #{tpu_custom_call.1} parent=0
    #allocation2 [shape = 'u8[1024]{0}', space=smem, size = 0x400, scoped, tag = 'input window, operand 0, single buffered']
    #allocation3 [shape = 's32[2]{0}', space=sflag, size = 0x8, scoped, tag = 'scoped memory for tpu_custom_call.1']
    %8 = vsyncpa [#allocation3], 0
    loop: start=0, step=1, limit=4
    $region2: #{tpu_custom_call.1} parent=1 // loop_pre_header
      _
    $region3: #{tpu_custom_call.1} parent=1 // loop_header
      %s10 = sphi 0, %s14
      %p11 = scmp.ge.s32.totalorder %s10, 4
      %s18 = sphi 0, %s18
      %s20 = sphi 0, %s18
      %s21 = sphi 0, %s20
      %s35 = sphi 0, %s21
      %s39 = sphi 0, %s39
      %s41 = sphi 0, %s39
      %s42 = sphi 0, %s41
      %s56 = sphi 0, %s42
      %s60 = sphi 0, %s60
      %s62 = sphi 0, %s60
      %s63 = sphi 0, %s62
      %s77 = sphi 0, %s63
      %s83 = sphi 0, %s85
      %s86 = sphi 0, %s83
      %s87 = sphi 0, %s86
      %s103 = sphi 0, %s87
    $region4: #{tpu_custom_call.1} parent=1 // loop_header_branch
      %13 = sbr.rel (%p11) target = $region8
    $region5: #{tpu_custom_call.1} parent=1 // loop_body
      %s15 = ssub.s32 %s10, 1
      %s16 = ssub.s32 %s10, 2
      %s17 = sadd.s32 %s10, 1
      %s19 = sadd.s32 %s18, 1
      %p22 = scmp.eq.s32.totalorder %s10, 1
      %p23 = scmp.ne.s32.totalorder %s18, %s20
      %p24 = scmp.eq.s32.totalorder %s10, 0
      %p25 = por %p23, %p24
      %p26 = scmp.ne.s32.totalorder %s18, %s20
      %p27 = scmp.eq.s32.totalorder %s15, 1
      %p28 = por %p26, %p27
      %p29 = scmp.ne.s32.totalorder %s20, %s21
      %p30 = scmp.eq.s32.totalorder %s15, 0
      %p31 = por %p29, %p30
      %p32 = scmp.ne.s32.totalorder %s20, %s21
      %p33 = scmp.eq.s32.totalorder %s16, 1
      %p34 = por %p32, %p33
      %p36 = scmp.ne.s32.totalorder %s21, %s35
      %p37 = scmp.eq.s32.totalorder %s16, 0
      %p38 = por %p36, %p37
      %s40 = sadd.s32 %s39, 1
      %p43 = scmp.eq.s32.totalorder %s10, 1
      %p44 = scmp.ne.s32.totalorder %s39, %s41
      %p45 = scmp.eq.s32.totalorder %s10, 0
      %p46 = por %p44, %p45
      %p47 = scmp.ne.s32.totalorder %s39, %s41
      %p48 = scmp.eq.s32.totalorder %s15, 1
      %p49 = por %p47, %p48
      %p50 = scmp.ne.s32.totalorder %s41, %s42
      %p51 = scmp.eq.s32.totalorder %s15, 0
      %p52 = por %p50, %p51
      %p53 = scmp.ne.s32.totalorder %s41, %s42
      %p54 = scmp.eq.s32.totalorder %s16, 1
      %p55 = por %p53, %p54
      %p57 = scmp.ne.s32.totalorder %s42, %s56
      %p58 = scmp.eq.s32.totalorder %s16, 0
      %p59 = por %p57, %p58
      %s61 = sadd.s32 %s60, 1
      %p64 = scmp.eq.s32.totalorder %s10, 1
      %p65 = scmp.ne.s32.totalorder %s60, %s62
      %p66 = scmp.eq.s32.totalorder %s10, 0
      %p67 = por %p65, %p66
      %p68 = scmp.ne.s32.totalorder %s60, %s62
      %p69 = scmp.eq.s32.totalorder %s15, 1
      %p70 = por %p68, %p69
      %p71 = scmp.ne.s32.totalorder %s62, %s63
      %p72 = scmp.eq.s32.totalorder %s15, 0
      %p73 = por %p71, %p72
      %p74 = scmp.ne.s32.totalorder %s62, %s63
      %p75 = scmp.eq.s32.totalorder %s16, 1
      %p76 = por %p74, %p75
      %p78 = scmp.ne.s32.totalorder %s63, %s77
      %p79 = scmp.eq.s32.totalorder %s16, 0
      %p80 = por %p78, %p79
      %s81 = ssub.s32 %s10, %s17
      %p82 = scmp.eq.s32.totalorder %s81, 0
      %s84 = sadd.s32 %s83, 1
      %s85 = scalar_select %p82, %s83, %s84
      %p88 = pneg %p82
      %p89 = scmp.eq.s32.totalorder %s10, 1
      %p90 = por %p88, %p89
      %p91 = scmp.ne.s32.totalorder %s83, %s86
      %p92 = scmp.eq.s32.totalorder %s10, 0
      %p93 = por %p91, %p92
      %p94 = scmp.ne.s32.totalorder %s83, %s86
      %p95 = scmp.eq.s32.totalorder %s15, 1
      %p96 = por %p94, %p95
      %p97 = scmp.ne.s32.totalorder %s86, %s87
      %p98 = scmp.eq.s32.totalorder %s15, 0
      %p99 = por %p97, %p98
      %p100 = scmp.ne.s32.totalorder %s86, %s87
      %p101 = scmp.eq.s32.totalorder %s16, 1
      %p102 = por %p100, %p101
      %p104 = scmp.ne.s32.totalorder %s87, %s103
      %p105 = scmp.eq.s32.totalorder %s16, 0
      %p106 = por %p104, %p105
      %p107 = scmp.le.s32.totalorder 1, %s10
      %p108 = scmp.lt.s32.totalorder %s10, 3
      %p109 = pnand %p107, %p108
      %p110 = pneg %p109
      // Predicated region
      $region9: #{tpu_custom_call.1} parent=5 // pred_check
        _
      $region10: #{tpu_custom_call.1} parent=5 // pred_check_branch
        %112 = sbr.rel (%p109) target = $region12
      $region11: #{tpu_custom_call.1} parent=5 // pred_region
        %s113 = ssub.s32 %s10, 1
        // Predicated region
        $region13: #{tpu_custom_call.1} parent=11 // pred_check
          %p114 = pneg %p31
        $region14: #{tpu_custom_call.1} parent=11 // pred_check_branch
          %116 = sbr.rel (%p114) target = $region16
        $region15: #{tpu_custom_call.1} parent=11 // pred_region
          %118 = vsyncadd [#allocation3], 0
          %s120 = sshll.u32 %s0, 4
          %s121 = int_to_ptr.vmem [resolvable:$true] %s120
          %123 = dma.vmem_to_smem %s121, 32, [#allocation2], [#allocation3]
        $region16: #{tpu_custom_call.1} parent=11 // pred_fallthru
          _
        // Predicated region
        $region17: #{tpu_custom_call.1} parent=11 // pred_check
          %p124 = pneg %p52
        $region18: #{tpu_custom_call.1} parent=11 // pred_check_branch
          %126 = sbr.rel (%p124) target = $region20
        $region19: #{tpu_custom_call.1} parent=11 // pred_region
          _
        $region20: #{tpu_custom_call.1} parent=11 // pred_fallthru
          _
        // Predicated region
        $region21: #{tpu_custom_call.1} parent=11 // pred_check
          %p127 = pneg %p73
        $region22: #{tpu_custom_call.1} parent=11 // pred_check_branch
          %129 = sbr.rel (%p127) target = $region24
        $region23: #{tpu_custom_call.1} parent=11 // pred_region
          _
        $region24: #{tpu_custom_call.1} parent=11 // pred_fallthru
          _
      $region12: #{tpu_custom_call.1} parent=5 // pred_fallthru
        _
      %p130 = scmp.lt.s32.totalorder %s10, 2
      // Predicated region
      $region25: #{tpu_custom_call.1} parent=5 // pred_check
        %p131 = pneg %p130
      $region26: #{tpu_custom_call.1} parent=5 // pred_check_branch
        %133 = sbr.rel (%p131) target = $region28
      $region27: #{tpu_custom_call.1} parent=5 // pred_region
        _
      $region28: #{tpu_custom_call.1} parent=5 // pred_fallthru
        _
      %p134 = scmp.le.s32.totalorder 1, %s10
      %p135 = scmp.lt.s32.totalorder %s10, 3
      %p136 = pnand %p134, %p135
      %p137 = pneg %p136
      // Predicated region
      $region29: #{tpu_custom_call.1} parent=5 // pred_check
        _
      $region30: #{tpu_custom_call.1} parent=5 // pred_check_branch
        %139 = sbr.rel (%p136) target = $region32
      $region31: #{tpu_custom_call.1} parent=5 // pred_region
        %s140 = ssub.s32 %s10, 1
        // Predicated region
        $region33: #{tpu_custom_call.1} parent=31 // pred_check
          %p141 = pneg %p31
        $region34: #{tpu_custom_call.1} parent=31 // pred_check_branch
          %143 = sbr.rel (%p141) target = $region36
        $region35: #{tpu_custom_call.1} parent=31 // pred_region
          %145 = dma.done [#allocation3], 32
        $region36: #{tpu_custom_call.1} parent=31 // pred_fallthru
          _
        %146 = sfence
        %p147 = pneg %p31
        %p148 = pneg %p28
        %p149 = pneg %p52
        %p150 = pneg %p49
        %p151 = pneg %p73
        %p152 = pneg %p70
        %p153 = pneg %p99
        %p154 = pneg %p96
        %p155 = scmp.lt.s32.totalorder %s15, 1
        %s156 = scalar_select %p155, %s15, 1
        %s157 = smul.addr %s156, 2
        %s158 = smul.addr %s157, 8
        %s159 = scalar_lea.vmem %s3, %s158
        %p160 = scmp.lt.s32.totalorder %s15, 1
        %s161 = scalar_select %p160, %s15, 1
        %s162 = smul.addr %s161, 2
        %s163 = smul.addr %s162, 8
        %s164 = scalar_lea.vmem %s3, %s163
        %v166 = vlaneseq
        %v167 = vshrl.u32 %v166, 7
        %v168 = vadd.s32 %v167, 8
        %v169 = vadd.s32 %v167, 16
        %v170 = vadd.s32 %v167, 24
        %v171 = vadd.s32 %v167, 32
        %v172 = vadd.s32 %v167, 40
        %v173 = vadd.s32 %v167, 48
        %v174 = vadd.s32 %v167, 56
        %v175 = vlaneseq
        %v176 = vand.u32 %v175, 127
        %vm177 = vcmp.eq.s32.totalorder %v167, %v176
        %vm178 = vcmp.eq.s32.totalorder %v168, %v176
        %vm179 = vcmp.eq.s32.totalorder %v169, %v176
        %vm180 = vcmp.eq.s32.totalorder %v170, %v176
        %vm181 = vcmp.eq.s32.totalorder %v171, %v176
        %vm182 = vcmp.eq.s32.totalorder %v172, %v176
        %vm183 = vcmp.eq.s32.totalorder %v173, %v176
        %vm184 = vcmp.eq.s32.totalorder %v174, %v176
        %v185 = vsel %vm177, 0.5, 0.0
        %v186 = vsel %vm178, 0.5, 0.0
        %v187 = vsel %vm179, 0.5, 0.0
        %v188 = vsel %vm180, 0.5, 0.0
        %v189 = vsel %vm181, 0.5, 0.0
        %v190 = vsel %vm182, 0.5, 0.0
        %v191 = vsel %vm183, 0.5, 0.0
        %v192 = vsel %vm184, 0.5, 0.0
        %v193 = vld [vmem:[%s1] sm:$0xff]
        %v194 = vld [vmem:[%s1 + $0x8] sm:$0xff]
        %v195 = vld [vmem:[%s1 + $0x10] sm:$0xff]
        %v196 = vld [vmem:[%s1 + $0x18] sm:$0xff]
        %v197 = vld [vmem:[%s1 + $0x20] sm:$0xff]
        %v198 = vld [vmem:[%s1 + $0x28] sm:$0xff]
        %v199 = vld [vmem:[%s1 + $0x30] sm:$0xff]
        %v200 = vld [vmem:[%s1 + $0x38] sm:$0xff]
        %v201 = vld [vmem:[%s2] sm:$0x7]
        %s202 = smul.u32 %s15, 128
        %s203 = sld [smem:[#allocation2 + %s202]]
        %v204 = vstv %s203
        %v205 = vmul.f32 %v193, %v204
        %v206 = vmul.f32 %v194, %v204
        %v207 = vmul.f32 %v195, %v204
        %v208 = vmul.f32 %v196, %v204
        %v209 = vmul.f32 %v197, %v204
        %v210 = vmul.f32 %v198, %v204
        %v211 = vmul.f32 %v199, %v204
        %v212 = vmul.f32 %v200, %v204
        %v213 = vmul.f32 %v201, %v204
        %215 = vset.pattern.permute.xlu0 0
        %216 = vperm.xlu0 %215, %v205
        %v217 = vpop.permute.xlu0 %216
        %220 = vset.pattern.permute.xlu0 0
        %221 = vperm.xlu0 %220, %v206
        %v222 = vpop.permute.xlu0 %221
        %225 = vset.pattern.permute.xlu0 0
        %226 = vperm.xlu0 %225, %v207
        %v227 = vpop.permute.xlu0 %226
        %230 = vset.pattern.permute.xlu0 0
        %231 = vperm.xlu0 %230, %v208
        %v232 = vpop.permute.xlu0 %231
        %235 = vset.pattern.permute.xlu0 0
        %236 = vperm.xlu0 %235, %v209
        %v237 = vpop.permute.xlu0 %236
        %240 = vset.pattern.permute.xlu0 0
        %241 = vperm.xlu0 %240, %v210
        %v242 = vpop.permute.xlu0 %241
        %245 = vset.pattern.permute.xlu0 0
        %246 = vperm.xlu0 %245, %v211
        %v247 = vpop.permute.xlu0 %246
        %250 = vset.pattern.permute.xlu0 0
        %251 = vperm.xlu0 %250, %v212
        %v252 = vpop.permute.xlu0 %251
        %v254 = vperm.slane %v213, 0
        %v255 = vsub.f32 %v217, %v254
        %v256 = vsub.f32 %v222, %v254
        %v257 = vsub.f32 %v227, %v254
        %v258 = vsub.f32 %v232, %v254
        %v259 = vsub.f32 %v237, %v254
        %v260 = vsub.f32 %v242, %v254
        %v261 = vsub.f32 %v247, %v254
        %v262 = vsub.f32 %v252, %v254
        %v263 = vmul.f32 %v255, %v255
        %v264 = vmul.f32 %v256, %v256
        %v265 = vmul.f32 %v257, %v257
        %v266 = vmul.f32 %v258, %v258
        %v267 = vmul.f32 %v259, %v259
        %v268 = vmul.f32 %v260, %v260
        %v269 = vmul.f32 %v261, %v261
        %v270 = vmul.f32 %v262, %v262
        %s271 = sadd.s32 %s202, 1
        %s272 = sld [smem:[#allocation2 + %s271]]
        %v273 = vstv %s272
        %v274 = vmul.f32 %v193, %v273
        %v275 = vmul.f32 %v194, %v273
        %v276 = vmul.f32 %v195, %v273
        %v277 = vmul.f32 %v196, %v273
        %v278 = vmul.f32 %v197, %v273
        %v279 = vmul.f32 %v198, %v273
        %v280 = vmul.f32 %v199, %v273
        %v281 = vmul.f32 %v200, %v273
        %v282 = vmul.f32 %v201, %v273
        %284 = vset.pattern.permute.xlu0 1
        %285 = vperm.xlu0 %284, %v274
        %v286 = vpop.permute.xlu0 %285
        %289 = vset.pattern.permute.xlu0 1
        %290 = vperm.xlu0 %289, %v275
        %v291 = vpop.permute.xlu0 %290
        %294 = vset.pattern.permute.xlu0 1
        %295 = vperm.xlu0 %294, %v276
        %v296 = vpop.permute.xlu0 %295
        %299 = vset.pattern.permute.xlu0 1
        %300 = vperm.xlu0 %299, %v277
        %v301 = vpop.permute.xlu0 %300
        %304 = vset.pattern.permute.xlu0 1
        %305 = vperm.xlu0 %304, %v278
        %v306 = vpop.permute.xlu0 %305
        %309 = vset.pattern.permute.xlu0 1
        %310 = vperm.xlu0 %309, %v279
        %v311 = vpop.permute.xlu0 %310
        %314 = vset.pattern.permute.xlu0 1
        %315 = vperm.xlu0 %314, %v280
        %v316 = vpop.permute.xlu0 %315
        %319 = vset.pattern.permute.xlu0 1
        %320 = vperm.xlu0 %319, %v281
        %v321 = vpop.permute.xlu0 %320
        %v323 = vperm.slane %v282, 1
        %v324 = vsub.f32 %v286, %v323
        %v325 = vsub.f32 %v291, %v323
        %v326 = vsub.f32 %v296, %v323
        %v327 = vsub.f32 %v301, %v323
        %v328 = vsub.f32 %v306, %v323
        %v329 = vsub.f32 %v311, %v323
        %v330 = vsub.f32 %v316, %v323
        %v331 = vsub.f32 %v321, %v323
        %v332 = vmul.f32 %v324, %v324
        %v333 = vmul.f32 %v325, %v325
        %v334 = vmul.f32 %v326, %v326
        %v335 = vmul.f32 %v327, %v327
        %v336 = vmul.f32 %v328, %v328
        %v337 = vmul.f32 %v329, %v329
        %v338 = vmul.f32 %v330, %v330
        %v339 = vmul.f32 %v331, %v331
        %v340 = vadd.f32 %v263, %v332
        %v341 = vadd.f32 %v264, %v333
        %v342 = vadd.f32 %v265, %v334
        %v343 = vadd.f32 %v266, %v335
        %v344 = vadd.f32 %v267, %v336
        %v345 = vadd.f32 %v268, %v337
        %v346 = vadd.f32 %v269, %v338
        %v347 = vadd.f32 %v270, %v339
        %s348 = sadd.s32 %s202, 2
        %s349 = sld [smem:[#allocation2 + %s348]]
        %v350 = vstv %s349
        %v351 = vmul.f32 %v193, %v350
        %v352 = vmul.f32 %v194, %v350
        %v353 = vmul.f32 %v195, %v350
        %v354 = vmul.f32 %v196, %v350
        %v355 = vmul.f32 %v197, %v350
        %v356 = vmul.f32 %v198, %v350
        %v357 = vmul.f32 %v199, %v350
        %v358 = vmul.f32 %v200, %v350
        %v359 = vmul.f32 %v201, %v350
        %361 = vset.pattern.permute.xlu0 2
        %362 = vperm.xlu0 %361, %v351
        %v363 = vpop.permute.xlu0 %362
        %366 = vset.pattern.permute.xlu0 2
        %367 = vperm.xlu0 %366, %v352
        %v368 = vpop.permute.xlu0 %367
        %371 = vset.pattern.permute.xlu0 2
        %372 = vperm.xlu0 %371, %v353
        %v373 = vpop.permute.xlu0 %372
        %376 = vset.pattern.permute.xlu0 2
        %377 = vperm.xlu0 %376, %v354
        %v378 = vpop.permute.xlu0 %377
        %381 = vset.pattern.permute.xlu0 2
        %382 = vperm.xlu0 %381, %v355
        %v383 = vpop.permute.xlu0 %382
        %386 = vset.pattern.permute.xlu0 2
        %387 = vperm.xlu0 %386, %v356
        %v388 = vpop.permute.xlu0 %387
        %391 = vset.pattern.permute.xlu0 2
        %392 = vperm.xlu0 %391, %v357
        %v393 = vpop.permute.xlu0 %392
        %396 = vset.pattern.permute.xlu0 2
        %397 = vperm.xlu0 %396, %v358
        %v398 = vpop.permute.xlu0 %397
        %v400 = vperm.slane %v359, 2
        %v401 = vsub.f32 %v363, %v400
        %v402 = vsub.f32 %v368, %v400
        %v403 = vsub.f32 %v373, %v400
        %v404 = vsub.f32 %v378, %v400
        %v405 = vsub.f32 %v383, %v400
        %v406 = vsub.f32 %v388, %v400
        %v407 = vsub.f32 %v393, %v400
        %v408 = vsub.f32 %v398, %v400
        %v409 = vmul.f32 %v401, %v401
        %v410 = vmul.f32 %v402, %v402
        %v411 = vmul.f32 %v403, %v403
        %v412 = vmul.f32 %v404, %v404
        %v413 = vmul.f32 %v405, %v405
        %v414 = vmul.f32 %v406, %v406
        %v415 = vmul.f32 %v407, %v407
        %v416 = vmul.f32 %v408, %v408
        %v417 = vadd.f32 %v340, %v409
        %v418 = vadd.f32 %v341, %v410
        %v419 = vadd.f32 %v342, %v411
        %v420 = vadd.f32 %v343, %v412
        %v421 = vadd.f32 %v344, %v413
        %v422 = vadd.f32 %v345, %v414
        %v423 = vadd.f32 %v346, %v415
        %v424 = vadd.f32 %v347, %v416
        %v425 = vadd.f32 %v417, 0.01
        %v426 = vadd.f32 %v418, 0.01
        %v427 = vadd.f32 %v419, 0.01
        %v428 = vadd.f32 %v420, 0.01
        %v429 = vadd.f32 %v421, 0.01
        %v430 = vadd.f32 %v422, 0.01
        %v431 = vadd.f32 %v423, 0.01
        %v432 = vadd.f32 %v424, 0.01
        %v433 = vrcp.pop %v425
        %v434 = vmul.f32 %v425, %v433
        %v435 = vsub.f32 1.0, %v434
        %v436 = vmul.f32 %v433, %v435
        %v437 = vadd.f32 %v433, %v436
        %vm438 = vweird.f32 %v425
        %vm439 = vweird.f32 %v433
        %vm440 = vmor %vm438, %vm439
        %v441 = vsel %vm440, %v433, %v437
        %v442 = vand.u32 2147483647, %v425
        %vm443 = vcmp.eq.f32.partialorder %v442, 8.507059e+37
        %v444 = vand.u32 %v425, 2147483648
        %v445 = vor.u32 1.1754944e-38, %v444
        %v446 = vsel %vm443, %v445, %v441
        %v447 = vmul.f32 1.0, %v446
        %v448 = vrcp.pop %v426
        %v449 = vmul.f32 %v426, %v448
        %v450 = vsub.f32 1.0, %v449
        %v451 = vmul.f32 %v448, %v450
        %v452 = vadd.f32 %v448, %v451
        %vm453 = vweird.f32 %v426
        %vm454 = vweird.f32 %v448
        %vm455 = vmor %vm453, %vm454
        %v456 = vsel %vm455, %v448, %v452
        %v457 = vand.u32 2147483647, %v426
        %vm458 = vcmp.eq.f32.partialorder %v457, 8.507059e+37
        %v459 = vand.u32 %v426, 2147483648
        %v460 = vor.u32 1.1754944e-38, %v459
        %v461 = vsel %vm458, %v460, %v456
        %v462 = vmul.f32 1.0, %v461
        %v463 = vrcp.pop %v427
        %v464 = vmul.f32 %v427, %v463
        %v465 = vsub.f32 1.0, %v464
        %v466 = vmul.f32 %v463, %v465
        %v467 = vadd.f32 %v463, %v466
        %vm468 = vweird.f32 %v427
        %vm469 = vweird.f32 %v463
        %vm470 = vmor %vm468, %vm469
        %v471 = vsel %vm470, %v463, %v467
        %v472 = vand.u32 2147483647, %v427
        %vm473 = vcmp.eq.f32.partialorder %v472, 8.507059e+37
        %v474 = vand.u32 %v427, 2147483648
        %v475 = vor.u32 1.1754944e-38, %v474
        %v476 = vsel %vm473, %v475, %v471
        %v477 = vmul.f32 1.0, %v476
        %v478 = vrcp.pop %v428
        %v479 = vmul.f32 %v428, %v478
        %v480 = vsub.f32 1.0, %v479
        %v481 = vmul.f32 %v478, %v480
        %v482 = vadd.f32 %v478, %v481
        %vm483 = vweird.f32 %v428
        %vm484 = vweird.f32 %v478
        %vm485 = vmor %vm483, %vm484
        %v486 = vsel %vm485, %v478, %v482
        %v487 = vand.u32 2147483647, %v428
        %vm488 = vcmp.eq.f32.partialorder %v487, 8.507059e+37
        %v489 = vand.u32 %v428, 2147483648
        %v490 = vor.u32 1.1754944e-38, %v489
        %v491 = vsel %vm488, %v490, %v486
        %v492 = vmul.f32 1.0, %v491
        %v493 = vrcp.pop %v429
        %v494 = vmul.f32 %v429, %v493
        %v495 = vsub.f32 1.0, %v494
        %v496 = vmul.f32 %v493, %v495
        %v497 = vadd.f32 %v493, %v496
        %vm498 = vweird.f32 %v429
        %vm499 = vweird.f32 %v493
        %vm500 = vmor %vm498, %vm499
        %v501 = vsel %vm500, %v493, %v497
        %v502 = vand.u32 2147483647, %v429
        %vm503 = vcmp.eq.f32.partialorder %v502, 8.507059e+37
        %v504 = vand.u32 %v429, 2147483648
        %v505 = vor.u32 1.1754944e-38, %v504
        %v506 = vsel %vm503, %v505, %v501
        %v507 = vmul.f32 1.0, %v506
        %v508 = vrcp.pop %v430
        %v509 = vmul.f32 %v430, %v508
        %v510 = vsub.f32 1.0, %v509
        %v511 = vmul.f32 %v508, %v510
        %v512 = vadd.f32 %v508, %v511
        %vm513 = vweird.f32 %v430
        %vm514 = vweird.f32 %v508
        %vm515 = vmor %vm513, %vm514
        %v516 = vsel %vm515, %v508, %v512
        %v517 = vand.u32 2147483647, %v430
        %vm518 = vcmp.eq.f32.partialorder %v517, 8.507059e+37
        %v519 = vand.u32 %v430, 2147483648
        %v520 = vor.u32 1.1754944e-38, %v519
        %v521 = vsel %vm518, %v520, %v516
        %v522 = vmul.f32 1.0, %v521
        %v523 = vrcp.pop %v431
        %v524 = vmul.f32 %v431, %v523
        %v525 = vsub.f32 1.0, %v524
        %v526 = vmul.f32 %v523, %v525
        %v527 = vadd.f32 %v523, %v526
        %vm528 = vweird.f32 %v431
        %vm529 = vweird.f32 %v523
        %vm530 = vmor %vm528, %vm529
        %v531 = vsel %vm530, %v523, %v527
        %v532 = vand.u32 2147483647, %v431
        %vm533 = vcmp.eq.f32.partialorder %v532, 8.507059e+37
        %v534 = vand.u32 %v431, 2147483648
        %v535 = vor.u32 1.1754944e-38, %v534
        %v536 = vsel %vm533, %v535, %v531
        %v537 = vmul.f32 1.0, %v536
        %v538 = vrcp.pop %v432
        %v539 = vmul.f32 %v432, %v538
        %v540 = vsub.f32 1.0, %v539
        %v541 = vmul.f32 %v538, %v540
        %v542 = vadd.f32 %v538, %v541
        %vm543 = vweird.f32 %v432
        %vm544 = vweird.f32 %v538
        %vm545 = vmor %vm543, %vm544
        %v546 = vsel %vm545, %v538, %v542
        %v547 = vand.u32 2147483647, %v432
        %vm548 = vcmp.eq.f32.partialorder %v547, 8.507059e+37
        %v549 = vand.u32 %v432, 2147483648
        %v550 = vor.u32 1.1754944e-38, %v549
        %v551 = vsel %vm548, %v550, %v546
        %v552 = vmul.f32 1.0, %v551
        %vm553 = vcmp.le.f32.partialorder %v417, 0.0
        %vm554 = vcmp.le.f32.partialorder %v418, 0.0
        %vm555 = vcmp.le.f32.partialorder %v419, 0.0
        %vm556 = vcmp.le.f32.partialorder %v420, 0.0
        %vm557 = vcmp.le.f32.partialorder %v421, 0.0
        %vm558 = vcmp.le.f32.partialorder %v422, 0.0
        %vm559 = vcmp.le.f32.partialorder %v423, 0.0
        %vm560 = vcmp.le.f32.partialorder %v424, 0.0
        %vm561 = vcmp.lt.f32.partialorder %v447, 0.1
        %vm562 = vcmp.lt.f32.partialorder %v462, 0.1
        %vm563 = vcmp.lt.f32.partialorder %v477, 0.1
        %vm564 = vcmp.lt.f32.partialorder %v492, 0.1
        %vm565 = vcmp.lt.f32.partialorder %v507, 0.1
        %vm566 = vcmp.lt.f32.partialorder %v522, 0.1
        %vm567 = vcmp.lt.f32.partialorder %v537, 0.1
        %vm568 = vcmp.lt.f32.partialorder %v552, 0.1
        %vm569 = vmor %vm553, %vm561
        %vm570 = vmor %vm554, %vm562
        %vm571 = vmor %vm555, %vm563
        %vm572 = vmor %vm556, %vm564
        %vm573 = vmor %vm557, %vm565
        %vm574 = vmor %vm558, %vm566
        %vm575 = vmor %vm559, %vm567
        %vm576 = vmor %vm560, %vm568
        %v577 = vsel %vm569, 0.0, %v447
        %v578 = vsel %vm570, 0.0, %v462
        %v579 = vsel %vm571, 0.0, %v477
        %v580 = vsel %vm572, 0.0, %v492
        %v581 = vsel %vm573, 0.0, %v507
        %v582 = vsel %vm574, 0.0, %v522
        %v583 = vsel %vm575, 0.0, %v537
        %v584 = vsel %vm576, 0.0, %v552
        %vm585 = vcmask 523264
        %v586 = vsel %vm585, %v577, 0.0
        %v587 = vsel %vm585, %v578, 0.0
        %v588 = vadd.f32 %v586, %v587
        %v589 = vsel %vm585, %v579, 0.0
        %v590 = vadd.f32 %v588, %v589
        %v591 = vsel %vm585, %v580, 0.0
        %v592 = vadd.f32 %v590, %v591
        %v593 = vsel %vm585, %v581, 0.0
        %v594 = vadd.f32 %v592, %v593
        %v595 = vsel %vm585, %v582, 0.0
        %v596 = vadd.f32 %v594, %v595
        %v597 = vsel %vm585, %v583, 0.0
        %v598 = vadd.f32 %v596, %v597
        %v599 = vsel %vm585, %v584, 0.0
        %v600 = vadd.f32 %v598, %v599
        %v601 = vrot.slane %v600, 4
        %v602 = vadd.f32 %v600, %v601
        %v603 = vrot.slane %v602, 2
        %v604 = vadd.f32 %v602, %v603
        %v605 = vrot.slane %v604, 1
        %v606 = vadd.f32 %v604, %v605
        %vm607 = vcmp.gt.f32.partialorder %v606, 0.0
        %v608 = vmul.f32 %v606, 2.0
        %v609 = vrcp.pop %v608
        %v610 = vsel %vm607, %v609, 0.0
        %v611 = vmul.f32 %v577, %v610
        %v612 = vmul.f32 %v578, %v610
        %v613 = vmul.f32 %v579, %v610
        %v614 = vmul.f32 %v580, %v610
        %v615 = vmul.f32 %v581, %v610
        %v616 = vmul.f32 %v582, %v610
        %v617 = vmul.f32 %v583, %v610
        %v618 = vmul.f32 %v584, %v610
        %v619 = vadd.f32 %v611, %v185
        %v620 = vadd.f32 %v612, %v186
        %v621 = vadd.f32 %v613, %v187
        %v622 = vadd.f32 %v614, %v188
        %v623 = vadd.f32 %v615, %v189
        %v624 = vadd.f32 %v616, %v190
        %v625 = vadd.f32 %v617, %v191
        %v626 = vadd.f32 %v618, %v192
        %v627 = vpack.c.bf16 %v620, %v619
        %v628 = vpack.c.bf16 %v622, %v621
        %v629 = vpack.c.bf16 %v624, %v623
        %v630 = vpack.c.bf16 %v626, %v625
        %v631 = vpack.c.bf16 %v201, %v201
        %v633 = vsel %vm585, %v631, 0
        %635 = vmatpush.bf16.msra.mxu0 0
        %636 = vmatpush.bf16.msra.mxu0 0
        %637 = vmatpush.bf16.msra.mxu0 0
        %638 = vmatpush.bf16.msra.mxu0 0
        %639 = vmatpush.bf16.msra.mxu0 %v630
        %640 = vmatpush.bf16.msra.mxu0 %v629
        %641 = vmatpush.bf16.msra.mxu0 %v628
        %642 = vmatpush.bf16.msra.mxu0 %v627
        %643 = vmatmul.bf16.gmra.mxu0 %v633
        %v644 = vpop.f32.mrf.mxu0
        %v645 = vadd.f32 0.0, %v644
        %v646 = vpop.f32.mrf.mxu0
        %647 = vdwg.mxu0
        %v648 = vpack.c.bf16 %v645, %v645
        %v650 = vsel %vm585, %v648, 0
        %652 = vmatpush.bf16.msra.mxu0 0
        %653 = vmatpush.bf16.msra.mxu0 0
        %654 = vmatpush.bf16.msra.mxu0 0
        %655 = vmatpush.bf16.msra.mxu0 0
        %656 = vmatpush.bf16.msra.mxu0 %v630
        %657 = vmatpush.bf16.msra.mxu0 %v629
        %658 = vmatpush.bf16.msra.mxu0 %v628
        %659 = vmatpush.bf16.msra.mxu0 %v627
        %660 = vmatmul.bf16.gmra.mxu0 %v650
        %v661 = vpop.f32.mrf.mxu0
        %v662 = vadd.f32 0.0, %v661
        %v663 = vpop.f32.mrf.mxu0
        %664 = vdwg.mxu0
        %v665 = vpack.c.bf16 %v662, %v662
        %v667 = vsel %vm585, %v665, 0
        %669 = vmatpush.bf16.msra.mxu0 0
        %670 = vmatpush.bf16.msra.mxu0 0
        %671 = vmatpush.bf16.msra.mxu0 0
        %672 = vmatpush.bf16.msra.mxu0 0
        %673 = vmatpush.bf16.msra.mxu0 %v630
        %674 = vmatpush.bf16.msra.mxu0 %v629
        %675 = vmatpush.bf16.msra.mxu0 %v628
        %676 = vmatpush.bf16.msra.mxu0 %v627
        %677 = vmatmul.bf16.gmra.mxu0 %v667
        %v678 = vpop.f32.mrf.mxu0
        %v679 = vadd.f32 0.0, %v678
        %v680 = vpop.f32.mrf.mxu0
        %681 = vdwg.mxu0
        %v682 = vpack.c.bf16 %v679, %v679
        %v684 = vsel %vm585, %v682, 0
        %686 = vmatpush.bf16.msra.mxu0 0
        %687 = vmatpush.bf16.msra.mxu0 0
        %688 = vmatpush.bf16.msra.mxu0 0
        %689 = vmatpush.bf16.msra.mxu0 0
        %690 = vmatpush.bf16.msra.mxu0 %v630
        %691 = vmatpush.bf16.msra.mxu0 %v629
        %692 = vmatpush.bf16.msra.mxu0 %v628
        %693 = vmatpush.bf16.msra.mxu0 %v627
        %694 = vmatmul.bf16.gmra.mxu0 %v684
        %v695 = vpop.f32.mrf.mxu0
        %v696 = vadd.f32 0.0, %v695
        %v697 = vpop.f32.mrf.mxu0
        %698 = vdwg.mxu0
        %v699 = vpack.c.bf16 %v696, %v696
        %v701 = vsel %vm585, %v699, 0
        %703 = vmatpush.bf16.msra.mxu0 0
        %704 = vmatpush.bf16.msra.mxu0 0
        %705 = vmatpush.bf16.msra.mxu0 0
        %706 = vmatpush.bf16.msra.mxu0 0
        %707 = vmatpush.bf16.msra.mxu0 %v630
        %708 = vmatpush.bf16.msra.mxu0 %v629
        %709 = vmatpush.bf16.msra.mxu0 %v628
        %710 = vmatpush.bf16.msra.mxu0 %v627
        %711 = vmatmul.bf16.gmra.mxu0 %v701
        %v712 = vpop.f32.mrf.mxu0
        %v713 = vadd.f32 0.0, %v712
        %v714 = vpop.f32.mrf.mxu0
        %715 = vdwg.mxu0
        %v716 = vpack.c.bf16 %v713, %v713
        %v718 = vsel %vm585, %v716, 0
        %720 = vmatpush.bf16.msra.mxu0 0
        %721 = vmatpush.bf16.msra.mxu0 0
        %722 = vmatpush.bf16.msra.mxu0 0
        %723 = vmatpush.bf16.msra.mxu0 0
        %724 = vmatpush.bf16.msra.mxu0 %v630
        %725 = vmatpush.bf16.msra.mxu0 %v629
        %726 = vmatpush.bf16.msra.mxu0 %v628
        %727 = vmatpush.bf16.msra.mxu0 %v627
        %728 = vmatmul.bf16.gmra.mxu0 %v718
        %v729 = vpop.f32.mrf.mxu0
        %v730 = vadd.f32 0.0, %v729
        %v731 = vpop.f32.mrf.mxu0
        %732 = vdwg.mxu0
        %v733 = vpack.c.bf16 %v730, %v730
        %v735 = vsel %vm585, %v733, 0
        %737 = vmatpush.bf16.msra.mxu0 0
        %738 = vmatpush.bf16.msra.mxu0 0
        %739 = vmatpush.bf16.msra.mxu0 0
        %740 = vmatpush.bf16.msra.mxu0 0
        %741 = vmatpush.bf16.msra.mxu0 %v630
        %742 = vmatpush.bf16.msra.mxu0 %v629
        %743 = vmatpush.bf16.msra.mxu0 %v628
        %744 = vmatpush.bf16.msra.mxu0 %v627
        %745 = vmatmul.bf16.gmra.mxu0 %v735
        %v746 = vpop.f32.mrf.mxu0
        %v747 = vadd.f32 0.0, %v746
        %v748 = vpop.f32.mrf.mxu0
        %749 = vdwg.mxu0
        %v750 = vpack.c.bf16 %v747, %v747
        %v752 = vsel %vm585, %v750, 0
        %754 = vmatpush.bf16.msra.mxu0 0
        %755 = vmatpush.bf16.msra.mxu0 0
        %756 = vmatpush.bf16.msra.mxu0 0
        %757 = vmatpush.bf16.msra.mxu0 0
        %758 = vmatpush.bf16.msra.mxu0 %v630
        %759 = vmatpush.bf16.msra.mxu0 %v629
        %760 = vmatpush.bf16.msra.mxu0 %v628
        %761 = vmatpush.bf16.msra.mxu0 %v627
        %762 = vmatmul.bf16.gmra.mxu0 %v752
        %v763 = vpop.f32.mrf.mxu0
        %v764 = vadd.f32 0.0, %v763
        %v765 = vpop.f32.mrf.mxu0
        %766 = vdwg.mxu0
        %v767 = vsub.f32 %v645, %v662
        %v768 = vand.u32 2147483647, %v767
        %v769 = vsub.f32 %v662, %v696
        %v770 = vand.u32 2147483647, %v769
        %v771 = vsub.f32 %v696, %v764
        %v772 = vand.u32 2147483647, %v771
        %vm773 = vcmask 518144
        %774 = vst.msk [vmem:[%s164] sm:$0x7] %vm773, %v764
        %775 = vst.msk [vmem:[%s164 + $0x3] sm:$0x7] %vm773, %v768
        %776 = vst.msk [vmem:[%s164 + $0x6] sm:$0x7] %vm773, %v770
        %777 = vst.msk [vmem:[%s164 + $0x9] sm:$0x7] %vm773, %v772
        %p778 = scmp.lt.s32.totalorder %s15, 1
        %s779 = scalar_select %p778, %s15, 1
        %s780 = smul.addr %s779, 2
        %s781 = smul.addr %s780, 8
        %s782 = scalar_lea.vmem %s3, %s781
        // Predicated region
        $region37: #{tpu_custom_call.1} parent=31 // pred_check
          %p783 = pneg %p96
        $region38: #{tpu_custom_call.1} parent=31 // pred_check_branch
          %785 = sbr.rel (%p783) target = $region40
        $region39: #{tpu_custom_call.1} parent=31 // pred_region
          _
        $region40: #{tpu_custom_call.1} parent=31 // pred_fallthru
          _
      $region32: #{tpu_custom_call.1} parent=5 // pred_fallthru
        _
      %p786 = scmp.le.s32.totalorder 2, %s10
      // Predicated region
      $region41: #{tpu_custom_call.1} parent=5 // pred_check
        %p787 = pneg %p786
      $region42: #{tpu_custom_call.1} parent=5 // pred_check_branch
        %789 = sbr.rel (%p787) target = $region44
      $region43: #{tpu_custom_call.1} parent=5 // pred_region
        %s790 = ssub.s32 %s10, 2
        // Predicated region
        $region45: #{tpu_custom_call.1} parent=43 // pred_check
          %p791 = pneg %p102
        $region46: #{tpu_custom_call.1} parent=43 // pred_check_branch
          %793 = sbr.rel (%p791) target = $region48
        $region47: #{tpu_custom_call.1} parent=43 // pred_region
          %p794 = scmp.lt.s32.totalorder %s16, 1
          %s795 = scalar_select %p794, %s16, 1
          %s796 = smul.addr %s795, 2
          %s797 = smul.addr %s796, 8
          %s798 = scalar_lea.vmem %s3, %s797
        $region48: #{tpu_custom_call.1} parent=43 // pred_fallthru
          _
      $region44: #{tpu_custom_call.1} parent=5 // pred_fallthru
        _
    $region6: #{tpu_custom_call.1} parent=1 // loop_footer
      %s14 = sadd.s32 1, %s10
    $region7: #{tpu_custom_call.1} parent=1 // loop_footer_branch
      %9 = sbr.rel target = $region3
    $region8: #{tpu_custom_call.1} parent=1 // loop_exit
      _
    %799 = vsyncpa [#allocation3], 1
    %s800 = scalar_lea.sflag [#allocation3], 1
    %801 = vsyncpa %s800, 1

</llo_original>
